<compile_context>
chip_gen: v7x
topology: tpu7x:2x2x1
jax: 0.10.0
libtpu: 0.0.40
codegen_flags: <defaults>
</compile_context>

<pallas_src>
import jax
import jax.numpy as jnp
from jax import lax
from jax.experimental import pallas as pl
from jax.experimental.pallas import tpu as pltpu

TEMPERATURE = 0.1   # nn.Module __init__ default
EPS = 1e-8          # F.cosine_similarity eps (per-norm clamp)


def _vmem_budget_bytes():
    """Per-generation VMEM budget: ~half of physical VMEM.
    v5e/v6e (128 MiB) -> 64 MiB, v7x (64 MiB) -> 32 MiB."""
    default_cap = 128 * 1024 * 1024
    try:
        info = pltpu.get_tpu_info()
        cap = int(getattr(info, "vmem_capacity_bytes", default_cap))
    except Exception:
        cap = default_cap
    return max(32 * 1024 * 1024, min(cap // 2, 96 * 1024 * 1024))


def _pixel_tile(P, C, itemsize, vmem_budget, max_tile_pixels=None):
    """Pick the pixel-tile width TP (multiple of 128).

    Target several MiB of q per grid step (to hide the ~0.35us per-step pipeline
    overhead) while keeping the double-buffered q tile + f32 epilogue temps well
    inside the VMEM budget.
    """
    # per pixel-column: 2x double-buffered native q tile + f32 cast/square temp
    # for the norm + a few (1, TP) f32 rows.
    bytes_per_col = 2 * C * itemsize + 4 * C + 8 * 4
    cap_tp = max(128, int((vmem_budget * 3 // 4) // bytes_per_col))
    target_bytes = min(8 * 1024 * 1024, vmem_budget // 6)
    target_tp = max(128, int(target_bytes // (C * itemsize)))
    tp = min(cap_tp, target_tp)
    if max_tile_pixels is not None:
        tp = min(tp, int(max_tile_pixels))
    tp = max(128, (tp // 128) * 128)
    p_ceil = ((P + 127) // 128) * 128
    return min(tp, p_ceil)


def contrastive_loss(q_features, prototypes, q_masks, temperature=TEMPERATURE,
                     max_tile_pixels=None):
    """q_features: (B, C, H, W) or (B, H, W); prototypes: (B, K, C); q_masks: (B, H, W) int."""
    if q_features.ndim == 3:
        B, H, W = q_features.shape
        q = q_features.reshape(B, 1, H * W)
    else:
        B, C_, H, W = q_features.shape
        q = q_features.reshape(B, C_, H * W)
    B, C, P = q.shape
    K = prototypes.shape[1]
    masks = q_masks.reshape(B, P)

    # ---- tiny per-batch prototype bookkeeping, hoisted out of the kernel ----
    proto = prototypes.astype(jnp.float32)
    class_ids = jnp.arange(K, dtype=masks.dtype)
    # presence[b, k] = 1 iff class k appears anywhere in q_masks[b]
    # (compare -> any reduces over P and fuses; no B*K*P f32 intermediate)
    presence = jnp.any(class_ids[None, :, None] == masks[:, None, :],
                       axis=2).astype(jnp.float32)                                   # (B, K)
    pos_count = jnp.sum(presence, axis=1, keepdims=True)                             # (B, 1)
    neg_count = jnp.float32(K) - pos_count
    # NOTE: if every class appears, neg_count == 0 and the result is NaN -- identical
    # to the PyTorch module (0/0 in neg_similarity); intentionally not guarded.

    proto_norm = jnp.sqrt(jnp.sum(proto * proto, axis=2))                            # (B, K)
    inv_pn = 1.0 / jnp.maximum(proto_norm, EPS)
    pos_w = jnp.einsum("bk,bkc->bc", presence * inv_pn, proto) / pos_count
    neg_w = jnp.einsum("bk,bkc->bc", (1.0 - presence) * inv_pn, proto) / neg_count
    w = ((neg_w - pos_w) / temperature)[:, None, :].astype(q.dtype)                  # (B, 1, C)

    itemsize = q.dtype.itemsize
    vmem_budget = _vmem_budget_bytes()
    TP = _pixel_tile(P, C, itemsize, vmem_budget, max_tile_pixels)
    n_tiles = pl.cdiv(P, TP)
    # keep a parallel grid axis of extent >= 2 for v7x's two TensorCores even if B == 1
    n_outer = 2 if (B < 2 and n_tiles >= 2) else 1
    n_inner = pl.cdiv(n_tiles, n_outer)
    last_tile = n_tiles - 1

    def kernel(q_ref, w_ref, out_ref):
        # q_ref:   (1, C, TP)  query features for this (batch, pixel tile), native dtype
        # w_ref:   (1, 1, C)   folded (neg_w - pos_w)/T row for this batch (resident)
        # out_ref: (1, 1, 1)   f32 loss partial, resident across the inner (arbitrary) axis
        i = pl.program_id(2)

        @pl.when(i == 0)
        def _():
            out_ref[...] = jnp.zeros_like(out_ref)

        qv = q_ref[0]                                                  # (C, TP)
        wv = w_ref[0]                                                  # (1, C)

        # numerator of (neg_sim - pos_sim)/T: single-row MXU matmul over the tile
        d_num = jnp.dot(wv, qv, preferred_element_type=jnp.float32)   # (1, TP) f32

        # 1/||q_p|| -- elementwise math in f32 (v5e has no bf16 VPU/EUP path)
        qf = qv.astype(jnp.float32)
        qn2 = jnp.sum(qf * qf, axis=0, keepdims=True)                  # (1, TP)
        inv_qn = lax.rsqrt(jnp.maximum(qn2, jnp.float32(EPS * EPS)))

        d = d_num * inv_qn                                             # (neg_sim - pos_sim)/T
        # numerically stable softplus == -log(e_pos / (e_pos + e_neg))
        loss = jnp.maximum(d, 0.0) + jnp.log1p(jnp.exp(-jnp.abs(d)))

        # mask pixels past P (tail tile and padded grid steps contribute zero)
        t = pl.program_id(1) * n_inner + i
        lane = lax.broadcasted_iota(jnp.int32, (1, TP), 1)
        loss = jnp.where(lane < (P - t * TP), loss, 0.0)

        out_ref[...] += jnp.sum(loss, axis=1, keepdims=True).reshape(1, 1, 1)

    def q_index_map(b, o, i):
        # clamp padded steps (when n_outer does not divide n_tiles) onto the last
        # valid tile; their contribution is masked to zero inside the kernel.
        return (b, 0, jnp.minimum(o * n_inner + i, last_tile))

    cost = pl.CostEstimate(
        flops=int(4 * B * C * P + 8 * B * P),
        transcendentals=int(3 * B * P),
        bytes_accessed=int(B * C * P * itemsize + B * C * itemsize + B * n_outer * 4),
    )

    partials = pl.pallas_call(
        kernel,
        out_shape=jax.ShapeDtypeStruct((B * n_outer, 1, 1), jnp.float32),
        grid_spec=pltpu.PrefetchScalarGridSpec(
            num_scalar_prefetch=0,
            grid=(B, n_outer, n_inner),
            in_specs=[
                pl.BlockSpec((1, C, TP), q_index_map),
                pl.BlockSpec((1, 1, C), lambda b, o, i: (b, 0, 0)),
            ],
            out_specs=pl.BlockSpec((1, 1, 1), lambda b, o, i: (b * n_outer + o, 0, 0)),
        ),
        compiler_params=pltpu.CompilerParams(
            dimension_semantics=("parallel", "parallel", "arbitrary"),
            vmem_limit_bytes=int(vmem_budget),
        ),
        cost_estimate=cost,
    )(q, w)

    # Glue: scalar mean over all B*H*W pixels (matches loss.mean() in PyTorch).
    return jnp.sum(partials) / jnp.float32(B * P)


def _reference(q_features, prototypes, q_masks, T=TEMPERATURE):
    """Pure-JAX reference mirroring the PyTorch forward."""
    B, C, H, W = q_features.shape
    P = H * W
    K = prototypes.shape[1]
    q = q_features.reshape(B, C, P)
    m = q_masks.reshape(B, P)
    dots = jnp.einsum("bkc,bcp->bkp", prototypes, q)
    qn = jnp.sqrt(jnp.sum(q * q, axis=1))                     # (B, P)
    pn = jnp.sqrt(jnp.sum(prototypes * prototypes, axis=2))   # (B, K)
    sim = dots / jnp.maximum(pn[:, :, None] * qn[:, None, :], EPS)
    presence = jnp.max(
        (jnp.arange(K)[None, :, None] == m[:, None, :]).astype(jnp.float32), axis=2)   # (B, K)
    pos_count = presence.sum(axis=1, keepdims=True)
    neg_count = K - pos_count
    pos_sim = jnp.einsum("bk,bkp->bp", presence, sim) / pos_count
    neg_sim = jnp.einsum("bk,bkp->bp", 1.0 - presence, sim) / neg_count
    ep = jnp.exp(pos_sim / T)
    en = jnp.exp(neg_sim / T)
    return jnp.mean(-jnp.log(ep / (ep + en)))


if __name__ == "__main__":
    key = jax.random.PRNGKey(0)
    keys = jax.random.split(key, 12)

    loss_fn = jax.jit(contrastive_loss,
                      static_argnames=("temperature", "max_tile_pixels"))

    # Case 1: small shapes -> single pixel tile per batch element.
    B, C, H, W, K = 2, 32, 16, 16, 4
    q_features = jax.random.normal(keys[0], (B, C, H, W), jnp.float32)
    prototypes = jax.random.normal(keys[1], (B, K, C), jnp.float32)
    # class indices in [0, K-1): keeps the negative prototype set non-empty
    q_masks = jax.random.randint(keys[2], (B, H, W), 0, K - 1, jnp.int32)
    loss1 = loss_fn(q_features, prototypes, q_masks)
    jax.block_until_ready(loss1)
    ref1 = _reference(q_features, prototypes, q_masks)
    assert jnp.allclose(loss1, ref1, atol=1e-5, rtol=1e-5), (loss1, ref1)

    # Case 2: larger spatial size, B=2 -> parallel batch axis, auto (large) tile.
    B, C, H, W, K = 2, 32, 32, 64, 6
    q_features = jax.random.normal(keys[3], (B, C, H, W), jnp.float32)
    prototypes = jax.random.normal(keys[4], (B, K, C), jnp.float32)
    q_masks = jax.random.randint(keys[5], (B, H, W), 0, K - 1, jnp.int32)
    loss2 = loss_fn(q_features, prototypes, q_masks)
    jax.block_until_ready(loss2)
    ref2 = _reference(q_features, prototypes, q_masks)
    assert jnp.allclose(loss2, ref2, atol=1e-5, rtol=1e-5), (loss2, ref2)

    # Case 3: B=1 with a forced small tile -> exercises the two-level pixel split
    # (outer parallel axis for v7x), in-kernel accumulation across the arbitrary
    # axis, a partial tail tile and one clamped/padded grid step.
    B, C, H, W, K = 1, 32, 32, 64, 5
    q_features = jax.random.normal(keys[6], (B, C, H, W), jnp.float32)
    prototypes = jax.random.normal(keys[7], (B, K, C), jnp.float32)
    q_masks = jax.random.randint(keys[8], (B, H, W), 0, K - 1, jnp.int32)
    loss3 = loss_fn(q_features, prototypes, q_masks, max_tile_pixels=768)
    jax.block_until_ready(loss3)
    ref3 = _reference(q_features, prototypes, q_masks)
    assert jnp.allclose(loss3, ref3, atol=1e-5, rtol=1e-5), (loss3, ref3)

    # Case 4: spatial size not a multiple of 128 -> tail masking of OOB lanes.
    B, C, H, W, K = 2, 16, 15, 20, 3
    q_features = jax.random.normal(keys[9], (B, C, H, W), jnp.float32)
    prototypes = jax.random.normal(keys[10], (B, K, C), jnp.float32)
    q_masks = jax.random.randint(keys[11], (B, H, W), 0, K - 1, jnp.int32)
    loss4 = loss_fn(q_features, prototypes, q_masks)
    jax.block_until_ready(loss4)
    ref4 = _reference(q_features, prototypes, q_masks)
    assert jnp.allclose(loss4, ref4, atol=1e-5, rtol=1e-5), (loss4, ref4)

    print("KERNEL_OK")
</pallas_src>

<mosaic_0001>
module attributes {stable_mosaic.version = 11 : i64} {
  func.func @kernel(%arg0: i32, %arg1: i32, %arg2: i32, %arg3: memref<1x32x256xf32, #tpu.memory_space<vmem>>, %arg4: memref<1x1x32xf32, #tpu.memory_space<vmem>>, %arg5: memref<1x1x1xf32, #tpu.memory_space<vmem>>) attributes {dimension_semantics = [#tpu.dimension_semantics<parallel>, #tpu.dimension_semantics<parallel>, #tpu.dimension_semantics<arbitrary>], iteration_bounds = array<i64: 2, 1, 1>, scalar_prefetch = 0 : i64, scratch_operands = 0 : i64, tpu.core_type = #tpu.core_type<tc>, window_params = [{transform_indices = @transform_0, window_bounds = array<i64: 1, 32, 256>}, {transform_indices = @transform_1, window_bounds = array<i64: 1, 1, 32>}, {transform_indices = @transform_2, window_bounds = array<i64: 1, 1, 1>}]} {
    %c0_i32 = arith.constant 0 : i32
    %0 = arith.cmpi eq, %arg2, %c0_i32 : i32
    %1 = arith.extui %0 : i1 to i32
    %c0_i32_0 = arith.constant 0 : i32
    %2 = arith.cmpi ne, %1, %c0_i32_0 : i32
    scf.if %2 {
      %cst_19 = arith.constant 0.000000e+00 : f32
      %38 = vector.broadcast %cst_19 : f32 to vector<1x1x1xf32>
      %c0_20 = arith.constant 0 : index
      %c0_21 = arith.constant 0 : index
      %c0_22 = arith.constant 0 : index
      %39 = vector.load %arg5[%c0_20, %c0_21, %c0_22] : memref<1x1x1xf32, #tpu.memory_space<vmem>>, vector<1x1x1xf32>
      tpu.vector_store %arg5[%c0_20, %c0_21, %c0_22], %38 {strides = array<i32>} : memref<1x1x1xf32, #tpu.memory_space<vmem>>, vector<1x1x1xf32>,
    } else {
    }
    %c0 = arith.constant 0 : index
    %c0_1 = arith.constant 0 : index
    %c0_2 = arith.constant 0 : index
    %3 = vector.load %arg3[%c0, %c0_1, %c0_2] : memref<1x32x256xf32, #tpu.memory_space<vmem>>, vector<1x32x256xf32>
    %4 = vector.shape_cast %3 : vector<1x32x256xf32> to vector<32x256xf32>
    %c0_3 = arith.constant 0 : index
    %c0_4 = arith.constant 0 : index
    %c0_5 = arith.constant 0 : index
    %5 = vector.load %arg4[%c0_3, %c0_4, %c0_5] : memref<1x1x32xf32, #tpu.memory_space<vmem>>, vector<1x1x32xf32>
    %6 = vector.shape_cast %5 : vector<1x1x32xf32> to vector<1x32xf32>
    %cst = arith.constant dense<0.000000e+00> : vector<1x256xf32>
    %7 = tpu.matmul %6, %4, %cst {dimension_numbers = #tpu.dot_dimension_numbers<[1], [0], [0], [1], [0, 0, 1, 1], [], []>} : vector<1x32xf32>, vector<32x256xf32>, vector<1x256xf32> -> vector<1x256xf32>
    %8 = arith.mulf %4, %4 : vector<32x256xf32>
    %cst_6 = arith.constant dense<0.000000e+00> : vector<256xf32>
    %9 = vector.multi_reduction <add>, %8, %cst_6 [0] : vector<32x256xf32> to vector<256xf32>
    %10 = vector.shape_cast %9 : vector<256xf32> to vector<1x256xf32>
    %cst_7 = arith.constant 1.000000e-16 : f32
    %11 = vector.broadcast %cst_7 : f32 to vector<1x256xf32>
    %12 = arith.maximumf %10, %11 : vector<1x256xf32>
    %13 = math.rsqrt %12 : vector<1x256xf32>
    %14 = arith.mulf %7, %13 : vector<1x256xf32>
    %cst_8 = arith.constant 0.000000e+00 : f32
    %15 = vector.broadcast %cst_8 : f32 to vector<1x256xf32>
    %16 = arith.maximumf %14, %15 : vector<1x256xf32>
    %17 = math.absf %14 : vector<1x256xf32>
    %cst_9 = arith.constant 0.000000e+00 : f32
    %18 = vector.broadcast %cst_9 : f32 to vector<1x256xf32>
    %19 = arith.subf %18, %17 : vector<1x256xf32>
    %20 = math.exp %19 : vector<1x256xf32>
    %21 = math.log1p %20 : vector<1x256xf32>
    %22 = arith.addf %16, %21 : vector<1x256xf32>
    %c1_i32 = arith.constant 1 : i32
    %23 = arith.muli %arg1, %c1_i32 : i32
    %24 = arith.addi %23, %arg2 : i32
    %25 = tpu.iota {dimensions = array<i32: 1>} : vector<1x256xi32>
    %c256_i32 = arith.constant 256 : i32
    %26 = arith.muli %24, %c256_i32 : i32
    %c256_i32_10 = arith.constant 256 : i32
    %27 = arith.subi %c256_i32_10, %26 : i32
    %28 = vector.broadcast %27 : i32 to vector<1x256xi32>
    %29 = arith.cmpi slt, %25, %28 : vector<1x256xi32>
    %cst_11 = arith.constant 0.000000e+00 : f32
    %30 = vector.broadcast %cst_11 : f32 to vector<1x256xf32>
    %31 = arith.select %29, %22, %30 : vector<1x256xi1>, vector<1x256xf32>
    %c0_12 = arith.constant 0 : index
    %c0_13 = arith.constant 0 : index
    %c0_14 = arith.constant 0 : index
    %32 = vector.load %arg5[%c0_12, %c0_13, %c0_14] : memref<1x1x1xf32, #tpu.memory_space<vmem>>, vector<1x1x1xf32>
    %cst_15 = arith.constant dense<0.000000e+00> : vector<1xf32>
    %33 = vector.multi_reduction <add>, %31, %cst_15 [1] : vector<1x256xf32> to vector<1xf32>
    %34 = vector.shape_cast %33 : vector<1xf32> to vector<1x1xf32>
    %35 = vector.shape_cast %34 : vector<1x1xf32> to vector<1x1x1xf32>
    %36 = arith.addf %32, %35 : vector<1x1x1xf32>
    %c0_16 = arith.constant 0 : index
    %c0_17 = arith.constant 0 : index
    %c0_18 = arith.constant 0 : index
    %37 = vector.load %arg5[%c0_16, %c0_17, %c0_18] : memref<1x1x1xf32, #tpu.memory_space<vmem>>, vector<1x1x1xf32>
    tpu.vector_store %arg5[%c0_16, %c0_17, %c0_18], %36 {strides = array<i32>} : memref<1x1x1xf32, #tpu.memory_space<vmem>>, vector<1x1x1xf32>,
    return
  }
  func.func @transform_0(%arg0: i32, %arg1: i32, %arg2: i32) -> (i32, i32, i32) {
    %c1_i32 = arith.constant 1 : i32
    %0 = arith.muli %arg1, %c1_i32 : i32
    %1 = arith.addi %0, %arg2 : i32
    %c0_i32 = arith.constant 0 : i32
    %2 = arith.minsi %1, %c0_i32 : i32
    %c0_i32_0 = arith.constant 0 : i32
    %c0_i32_1 = arith.constant 0 : i32
    return %arg0, %c0_i32_0, %2 : i32, i32, i32
  }
  func.func @transform_1(%arg0: i32, %arg1: i32, %arg2: i32) -> (i32, i32, i32) {
    %c0_i32 = arith.constant 0 : i32
    %c0_i32_0 = arith.constant 0 : i32
    %c0_i32_1 = arith.constant 0 : i32
    return %arg0, %c0_i32, %c0_i32_0 : i32, i32, i32
  }
  func.func @transform_2(%arg0: i32, %arg1: i32, %arg2: i32) -> (i32, i32, i32) {
    %c1_i32 = arith.constant 1 : i32
    %0 = arith.muli %arg0, %c1_i32 : i32
    %1 = arith.addi %0, %arg1 : i32
    %c0_i32 = arith.constant 0 : i32
    %c0_i32_0 = arith.constant 0 : i32
    %c0_i32_1 = arith.constant 0 : i32
    return %1, %c0_i32, %c0_i32_0 : i32, i32, i32
  }
}

</mosaic_0001>

<llo_original>
// kernel: eq.11
$region0: #{eq.11}
  %s0 = inlined_call_operand.hbm [shape: s32[2,16,16], index: 0, kind: input, shape index: {}]
  %s1 = inlined_call_operand.vmem [shape: s32[2,256], index: 1, kind: output, shape index: {}]
  $region1: #{eq.11} parent=0
    #allocation0 [shape = 'u8[16384]{0}', space=vmem, size = 0x4000, scoped, tag = 'operand span for operand 0']
    #allocation1 [shape = 's32[1]{0}', space=sflag, size = 0x4, scoped, tag = 'scoped memory for eq.11']
    #allocation2 [shape = 'u8[8192]{0}', space=vmem, size = 0x2000, scoped, tag = 'scoped mem for output reshape']
    %2 = vsyncpa [#allocation1], 0
    %s4 = ssub.s32 512, 512
    %5 = vsyncadd [#allocation1], %s4
    %s7 = sshll.u32 [#allocation0], 4
    %s8 = int_to_ptr.vmem [resolvable:$true] %s7
    %10 = dma.hbm_to_vmem [thread:$0]  %s0, 512, %s8, [#allocation1]
    %11 = dma.done [#allocation1], 512
    %v12 = vld [vmem:[#allocation0] ss:$8 sm:$0xf]
    %vm13 = vcmask 130048
    %14 = vst.msk [vmem:[#allocation2] ss:$8 sm:$0x3] %vm13, %v12
    %s15 = scalar_lea.vmem [#allocation2], 4294967281
    %16 = vst.msk [vmem:[%s15] ss:$8 sm:$0xc] %vm13, %v12
    %s17 = scalar_lea.vmem [#allocation0], 7
    %s18 = smov 3
    %v19 = vld [vmem:[%s17] ss:$16 sm:%s18]
    %s20 = scalar_lea.vmem [#allocation0], 4294967279
    %s21 = smov 12
    %v22 = vld [vmem:[%s20] ss:$16 sm:%s21]
    %vm23 = vcmask 1043458
    %v24 = vsel %vm23, %v22, %v19
    %25 = vrot.lane.b32.xlu0 %v24, 112
    %v26 = vpop.permute.xlu0 %25
    %vm27 = vcmask 1048448
    %28 = vst.msk [vmem:[#allocation2] sm:$0x3] %vm27, %v26
    %s29 = scalar_lea.vmem [#allocation2], 6
    %30 = vst.msk [vmem:[%s29] sm:$0xc] %vm27, %v26
    %s31 = scalar_lea.vmem [#allocation0], 6
    %s32 = smov 3
    %v33 = vld [vmem:[%s31] ss:$16 sm:%s32]
    %s34 = scalar_lea.vmem [#allocation0], 4294967278
    %s35 = smov 12
    %v36 = vld [vmem:[%s34] ss:$16 sm:%s35]
    %vm37 = vcmask 1043458
    %v38 = vsel %vm37, %v36, %v33
    %39 = vrot.lane.b32.xlu0 %v38, 96
    %v40 = vpop.permute.xlu0 %39
    %vm41 = vcmask 917248
    %42 = vst.msk [vmem:[#allocation2] sm:$0x3] %vm41, %v40
    %s43 = scalar_lea.vmem [#allocation2], 6
    %44 = vst.msk [vmem:[%s43] sm:$0xc] %vm41, %v40
    %s45 = scalar_lea.vmem [#allocation0], 5
    %s46 = smov 3
    %v47 = vld [vmem:[%s45] ss:$16 sm:%s46]
    %s48 = scalar_lea.vmem [#allocation0], 4294967277
    %s49 = smov 12
    %v50 = vld [vmem:[%s48] ss:$16 sm:%s49]
    %vm51 = vcmask 1043458
    %v52 = vsel %vm51, %v50, %v47
    %53 = vrot.lane.b32.xlu0 %v52, 80
    %v54 = vpop.permute.xlu0 %53
    %vm55 = vcmask 786048
    %56 = vst.msk [vmem:[#allocation2] sm:$0x3] %vm55, %v54
    %s57 = scalar_lea.vmem [#allocation2], 6
    %58 = vst.msk [vmem:[%s57] sm:$0xc] %vm55, %v54
    %s59 = scalar_lea.vmem [#allocation0], 4
    %s60 = smov 3
    %v61 = vld [vmem:[%s59] ss:$16 sm:%s60]
    %s62 = scalar_lea.vmem [#allocation0], 4294967276
    %s63 = smov 12
    %v64 = vld [vmem:[%s62] ss:$16 sm:%s63]
    %vm65 = vcmask 1043458
    %v66 = vsel %vm65, %v64, %v61
    %67 = vrot.lane.b32.xlu0 %v66, 64
    %v68 = vpop.permute.xlu0 %67
    %vm69 = vcmask 654848
    %70 = vst.msk [vmem:[#allocation2] sm:$0x3] %vm69, %v68
    %s71 = scalar_lea.vmem [#allocation2], 6
    %72 = vst.msk [vmem:[%s71] sm:$0xc] %vm69, %v68
    %s73 = scalar_lea.vmem [#allocation0], 3
    %s74 = smov 3
    %v75 = vld [vmem:[%s73] ss:$16 sm:%s74]
    %s76 = scalar_lea.vmem [#allocation0], 4294967275
    %s77 = smov 12
    %v78 = vld [vmem:[%s76] ss:$16 sm:%s77]
    %vm79 = vcmask 1043458
    %v80 = vsel %vm79, %v78, %v75
    %81 = vrot.lane.b32.xlu0 %v80, 48
    %v82 = vpop.permute.xlu0 %81
    %vm83 = vcmask 523648
    %84 = vst.msk [vmem:[#allocation2] sm:$0x3] %vm83, %v82
    %s85 = scalar_lea.vmem [#allocation2], 6
    %86 = vst.msk [vmem:[%s85] sm:$0xc] %vm83, %v82
    %s87 = scalar_lea.vmem [#allocation0], 2
    %s88 = smov 3
    %v89 = vld [vmem:[%s87] ss:$16 sm:%s88]
    %s90 = scalar_lea.vmem [#allocation0], 4294967274
    %s91 = smov 12
    %v92 = vld [vmem:[%s90] ss:$16 sm:%s91]
    %vm93 = vcmask 1043458
    %v94 = vsel %vm93, %v92, %v89
    %95 = vrot.lane.b32.xlu0 %v94, 32
    %v96 = vpop.permute.xlu0 %95
    %vm97 = vcmask 392448
    %98 = vst.msk [vmem:[#allocation2] sm:$0x3] %vm97, %v96
    %s99 = scalar_lea.vmem [#allocation2], 6
    %100 = vst.msk [vmem:[%s99] sm:$0xc] %vm97, %v96
    %s101 = scalar_lea.vmem [#allocation0], 1
    %s102 = smov 3
    %v103 = vld [vmem:[%s101] ss:$16 sm:%s102]
    %s104 = scalar_lea.vmem [#allocation0], 4294967273
    %s105 = smov 12
    %v106 = vld [vmem:[%s104] ss:$16 sm:%s105]
    %vm107 = vcmask 1043458
    %v108 = vsel %vm107, %v106, %v103
    %109 = vrot.lane.b32.xlu0 %v108, 16
    %v110 = vpop.permute.xlu0 %109
    %vm111 = vcmask 261248
    %112 = vst.msk [vmem:[#allocation2] sm:$0x3] %vm111, %v110
    %s113 = scalar_lea.vmem [#allocation2], 6
    %114 = vst.msk [vmem:[%s113] sm:$0xc] %vm111, %v110
    %s116 = sshllo.u32 0, 2
    %v118 = vld [vmem:[#allocation2] sm:%s116]
    %s119 = sshllo.u32 0, 2
    %120 = vst [vmem:[%s1] sm:%s119] %v118
    %s121 = scalar_lea.vmem [#allocation2], 8
    %v122 = vld [vmem:[%s121] sm:%s116]
    %s123 = sshllo.u32 0, 2
    %s124 = scalar_lea.vmem %s1, 2
    %125 = vst [vmem:[%s124] sm:%s123] %v122
    %126 = vsyncpa [#allocation1], 1

// kernel: contrastive_loss.1
$region0: #{contrastive_loss.1}
  #allocation0 [shape = 'u32[]', space=smem, size = 0x4, offset = 0x4, fixed_abs, tag = 'smem constant byte address 0x4 - core index']
  #allocation1 [shape = 'u32[144,128]{1,0:T(1,128)}', space=vmem, size = 0x12000, scoped, tag = 'internal scratch']
  %s0 = inlined_call_operand.hbm [shape: f32[2,32,256], index: 0, kind: input, shape index: {}]
  %s1 = inlined_call_operand.hbm [shape: f32[2,1,32], index: 1, kind: input, shape index: {}]
  %s2 = inlined_call_operand.hbm [shape: f32[2,1,1], index: 2, kind: output, shape index: {}]
  %s3 = sld [smem:[#allocation0]]
  $region53: #{contrastive_loss.1} parent=0
    _
  %s5 = ssub.s32 1, %s3
  %s6 = scalar_select 0, %s5, %s3
  $region1: #{contrastive_loss.1} parent=0
    #allocation2 [shape = 'u8[65536]{0}', space=vmem, size = 0x10000, scoped, tag = 'input window, operand 0']
    #allocation3 [shape = 's32[2]{0}', space=sflag, size = 0x8, scoped, tag = 'scoped memory for contrastive_loss.1']
    #allocation4 [shape = 's32[2]{0}', space=sflag, size = 0x8, scoped, tag = 'scoped memory for contrastive_loss.1']
    #allocation5 [shape = 'u8[1024]{0}', space=vmem, size = 0x400, scoped, tag = 'input window, operand 1']
    #allocation6 [shape = 's32[2]{0}', space=sflag, size = 0x8, scoped, tag = 'scoped memory for contrastive_loss.1']
    #allocation7 [shape = 'u8[1024]{0}', space=vmem, size = 0x400, scoped, tag = 'output window, operand 0']
    %7 = vsyncpa [#allocation3], 0
    %s8 = scalar_lea.sflag [#allocation3], 1
    %9 = vsyncpa %s8, 0
    %10 = vsyncpa [#allocation6], 0
    %s11 = scalar_lea.sflag [#allocation6], 1
    %12 = vsyncpa %s11, 0
    %13 = vsyncpa [#allocation4], 0
    %s14 = scalar_lea.sflag [#allocation4], 1
    %15 = vsyncpa %s14, 0
    loop: start=0, step=1, limit=4
    $region2: #{contrastive_loss.1} parent=1 // loop_pre_header
      _
    $region3: #{contrastive_loss.1} parent=1 // loop_header
      %s17 = sphi 0, %s21
      %p18 = scmp.ge.s32.totalorder %s17, 4
      %s24 = sphi 0, %s43
      %s25 = sphi 0, %s39
      %s26 = sphi 0, %s35
      %s27 = sphi 0, %s24
      %s28 = sphi 0, %s25
      %s29 = sphi 0, %s26
      %s30 = sphi 0, %s27
      %s31 = sphi 0, %s28
      %s32 = sphi 0, %s29
      %s54 = sphi 0, %s56
      %s57 = sphi 0, %s54
      %s58 = sphi 0, %s57
      %s74 = sphi 0, %s58
      %s80 = sphi 0, %s82
      %s83 = sphi 0, %s80
      %s84 = sphi 0, %s83
      %s100 = sphi 0, %s84
      %s108 = sphi 0, %s110
      %s111 = sphi 0, %s108
      %s112 = sphi 0, %s111
      %s128 = sphi 0, %s112
    $region4: #{contrastive_loss.1} parent=1 // loop_header_branch
      %20 = sbr.rel (%p18) target = $region8
    $region5: #{contrastive_loss.1} parent=1 // loop_body
      %s22 = ssub.s32 %s17, 1
      %s23 = ssub.s32 %s17, 2
      %s33 = sadd.s32 1, %s26
      %p34 = scmp.ge.s32.totalorder %s33, 1
      %s35 = scalar_select %p34, 0, %s33
      %s36 = sadd.s32 1, %s25
      %s37 = scalar_select %p34, %s36, %s25
      %p38 = scmp.ge.s32.totalorder %s37, 1
      %s39 = scalar_select %p38, 0, %s37
      %s40 = sadd.s32 1, %s24
      %s41 = scalar_select %p38, %s40, %s24
      %p42 = scmp.ge.s32.totalorder %s41, 2
      %s43 = scalar_select %p42, 0, %s41
      %s44 = sadd.s32 %s25, %s26
      %p45 = scmp.lt.s32.totalorder %s44, 0
      %s46 = scalar_select %p45, %s44, 0
      %s47 = sadd.s32 %s39, %s35
      %p48 = scmp.lt.s32.totalorder %s47, 0
      %s49 = scalar_select %p48, %s47, 0
      %s50 = ssub.s32 %s24, %s43
      %s51 = ssub.s32 %s46, %s49
      %s52 = sor.u32 %s50, %s51
      %p53 = scmp.eq.s32.totalorder %s52, 0
      %s55 = sadd.s32 %s54, 1
      %s56 = scalar_select %p53, %s54, %s55
      %p59 = pneg %p53
      %p60 = scmp.eq.s32.totalorder %s17, 1
      %p61 = por %p59, %p60
      %p62 = scmp.ne.s32.totalorder %s54, %s57
      %p63 = scmp.eq.s32.totalorder %s17, 0
      %p64 = por %p62, %p63
      %p65 = scmp.ne.s32.totalorder %s54, %s57
      %p66 = scmp.eq.s32.totalorder %s22, 1
      %p67 = por %p65, %p66
      %p68 = scmp.ne.s32.totalorder %s57, %s58
      %p69 = scmp.eq.s32.totalorder %s22, 0
      %p70 = por %p68, %p69
      %p71 = scmp.ne.s32.totalorder %s57, %s58
      %p72 = scmp.eq.s32.totalorder %s23, 1
      %p73 = por %p71, %p72
      %p75 = scmp.ne.s32.totalorder %s58, %s74
      %p76 = scmp.eq.s32.totalorder %s23, 0
      %p77 = por %p75, %p76
      %s78 = ssub.s32 %s24, %s43
      %p79 = scmp.eq.s32.totalorder %s78, 0
      %s81 = sadd.s32 %s80, 1
      %s82 = scalar_select %p79, %s80, %s81
      %p85 = pneg %p79
      %p86 = scmp.eq.s32.totalorder %s17, 1
      %p87 = por %p85, %p86
      %p88 = scmp.ne.s32.totalorder %s80, %s83
      %p89 = scmp.eq.s32.totalorder %s17, 0
      %p90 = por %p88, %p89
      %p91 = scmp.ne.s32.totalorder %s80, %s83
      %p92 = scmp.eq.s32.totalorder %s22, 1
      %p93 = por %p91, %p92
      %p94 = scmp.ne.s32.totalorder %s83, %s84
      %p95 = scmp.eq.s32.totalorder %s22, 0
      %p96 = por %p94, %p95
      %p97 = scmp.ne.s32.totalorder %s83, %s84
      %p98 = scmp.eq.s32.totalorder %s23, 1
      %p99 = por %p97, %p98
      %p101 = scmp.ne.s32.totalorder %s84, %s100
      %p102 = scmp.eq.s32.totalorder %s23, 0
      %p103 = por %p101, %p102
      %s104 = sadd.s32 %s24, %s25
      %s105 = sadd.s32 %s43, %s39
      %s106 = ssub.s32 %s104, %s105
      %p107 = scmp.eq.s32.totalorder %s106, 0
      %s109 = sadd.s32 %s108, 1
      %s110 = scalar_select %p107, %s108, %s109
      %p113 = pneg %p107
      %p114 = scmp.eq.s32.totalorder %s17, 1
      %p115 = por %p113, %p114
      %p116 = scmp.ne.s32.totalorder %s108, %s111
      %p117 = scmp.eq.s32.totalorder %s17, 0
      %p118 = por %p116, %p117
      %p119 = scmp.ne.s32.totalorder %s108, %s111
      %p120 = scmp.eq.s32.totalorder %s22, 1
      %p121 = por %p119, %p120
      %p122 = scmp.ne.s32.totalorder %s111, %s112
      %p123 = scmp.eq.s32.totalorder %s22, 0
      %p124 = por %p122, %p123
      %p125 = scmp.ne.s32.totalorder %s111, %s112
      %p126 = scmp.eq.s32.totalorder %s23, 1
      %p127 = por %p125, %p126
      %p129 = scmp.ne.s32.totalorder %s112, %s128
      %p130 = scmp.eq.s32.totalorder %s23, 0
      %p131 = por %p129, %p130
      %p132 = scmp.le.s32.totalorder 1, %s17
      %p133 = scmp.lt.s32.totalorder %s17, 3
      %p134 = pnand %p132, %p133
      %p135 = pneg %p134
      // Predicated region
      $region9: #{contrastive_loss.1} parent=5 // pred_check
        _
      $region10: #{contrastive_loss.1} parent=5 // pred_check_branch
        %137 = sbr.rel (%p134) target = $region12
      $region11: #{contrastive_loss.1} parent=5 // pred_region
        %s138 = ssub.s32 %s17, 1
      $region12: #{contrastive_loss.1} parent=5 // pred_fallthru
        _
      %p139 = scmp.lt.s32.totalorder %s17, 2
      // Predicated region
      $region13: #{contrastive_loss.1} parent=5 // pred_check
        %p140 = pneg %p139
      $region14: #{contrastive_loss.1} parent=5 // pred_check_branch
        %142 = sbr.rel (%p140) target = $region16
      $region15: #{contrastive_loss.1} parent=5 // pred_region
        // Predicated region
        $region17: #{contrastive_loss.1} parent=15 // pred_check
          %p143 = pneg %p64
        $region18: #{contrastive_loss.1} parent=15 // pred_check_branch
          %145 = sbr.rel (%p143) target = $region20
        $region19: #{contrastive_loss.1} parent=15 // pred_region
          %s146 = sand.u32 %s54, 1
          %s147 = scalar_lea.sflag [#allocation3], %s146
          %s148 = sand.u32 %s54, 1
          %s149 = smul.addr %s148, 64
          %s150 = scalar_lea.vmem [#allocation2], %s149
          %s151 = sadd.s32 %s25, %s26
          %p152 = scmp.lt.s32.totalorder %s151, 0
          %s153 = scalar_select %p152, %s151, 0
          %s154 = smul.u32 2, %s153
          %s156 = ssub.s32 1024, 1024
          %157 = vsyncadd %s147, %s156
          %s158 = smul.addr %s24, 8
          %s159 = sadd.s32 %s154, %s158
          %s160 = smul.addr %s159, 128
          %s161 = scalar_lea.hbm %s0, %s160
          %s162 = sshll.u32 %s150, 4
          %s163 = int_to_ptr.vmem [resolvable:$true] %s162
          %168 = dma.hbm_to_vmem [thread:$0]  %s161, 1024, %s163, %s147, 256, 256, 16
        $region20: #{contrastive_loss.1} parent=15 // pred_fallthru
          _
        // Predicated region
        $region21: #{contrastive_loss.1} parent=15 // pred_check
          %p169 = pneg %p90
        $region22: #{contrastive_loss.1} parent=15 // pred_check_branch
          %171 = sbr.rel (%p169) target = $region24
        $region23: #{contrastive_loss.1} parent=15 // pred_region
          %s172 = sand.u32 %s80, 1
          %s173 = scalar_lea.sflag [#allocation6], %s172
          %s174 = sand.u32 %s80, 1
          %s175 = scalar_lea.vmem [#allocation5], %s174
          %s177 = ssub.s32 16, 16
          %178 = vsyncadd %s173, %s177
          %s179 = smul.addr %s24, 16
          %s180 = scalar_lea.hbm %s1, %s179
          %s182 = sshll.u32 %s175, 4
          %s183 = int_to_ptr.vmem [resolvable:$true] %s182
          %185 = dma.hbm_to_vmem [thread:$0]  %s180, 16, %s183, %s173
        $region24: #{contrastive_loss.1} parent=15 // pred_fallthru
          _
      $region16: #{contrastive_loss.1} parent=5 // pred_fallthru
        _
      %p186 = scmp.le.s32.totalorder 1, %s17
      %p187 = scmp.lt.s32.totalorder %s17, 3
      %p188 = pnand %p186, %p187
      %p189 = pneg %p188
      // Predicated region
      $region25: #{contrastive_loss.1} parent=5 // pred_check
        _
      $region26: #{contrastive_loss.1} parent=5 // pred_check_branch
        %191 = sbr.rel (%p188) target = $region28
      $region27: #{contrastive_loss.1} parent=5 // pred_region
        %s192 = ssub.s32 %s17, 1
        %s193 = sand.u32 %s57, 1
        %s194 = scalar_lea.sflag [#allocation3], %s193
        %s195 = sand.u32 %s57, 1
        %s196 = smul.addr %s195, 64
        %s197 = scalar_lea.vmem [#allocation2], %s196
        // Predicated region
        $region29: #{contrastive_loss.1} parent=27 // pred_check
          %p198 = pneg %p70
        $region30: #{contrastive_loss.1} parent=27 // pred_check_branch
          %200 = sbr.rel (%p198) target = $region32
        $region31: #{contrastive_loss.1} parent=27 // pred_region
          %201 = dma.done %s194, 1024
        $region32: #{contrastive_loss.1} parent=27 // pred_fallthru
          _
        %s202 = sand.u32 %s83, 1
        %s203 = scalar_lea.sflag [#allocation6], %s202
        %s204 = sand.u32 %s83, 1
        %s205 = scalar_lea.vmem [#allocation5], %s204
        // Predicated region
        $region33: #{contrastive_loss.1} parent=27 // pred_check
          %p206 = pneg %p96
        $region34: #{contrastive_loss.1} parent=27 // pred_check_branch
          %208 = sbr.rel (%p206) target = $region36
        $region35: #{contrastive_loss.1} parent=27 // pred_region
          %209 = dma.done %s203, 16
        $region36: #{contrastive_loss.1} parent=27 // pred_fallthru
          _
        %s210 = sand.u32 %s57, 1
        %s211 = scalar_lea.sflag [#allocation3], %s210
        %s212 = sand.u32 %s57, 1
        %s213 = smul.addr %s212, 64
        %s214 = scalar_lea.vmem [#allocation2], %s213
        %p215 = pneg %p70
        %p216 = pneg %p67
        %s217 = sand.u32 %s83, 1
        %s218 = scalar_lea.sflag [#allocation6], %s217
        %s219 = sand.u32 %s83, 1
        %s220 = scalar_lea.vmem [#allocation5], %s219
        %p221 = pneg %p96
        %p222 = pneg %p93
        %p223 = pneg %p124
        %p224 = pneg %p121
        %s225 = sand.u32 %s111, 1
        %s226 = scalar_lea.sflag [#allocation4], %s225
        %s227 = sand.u32 %s111, 1
        %s228 = scalar_lea.vmem [#allocation7], %s227
        %s229 = sadd.s32 %s28, %s29
        %p230 = scmp.lt.s32.totalorder %s229, 0
        %s231 = scalar_select %p230, %s229, 0
        %s232 = smul.u32 2, %s231
        %s233 = sadd.s32 %s27, %s28
        %p234 = scmp.eq.s32.totalorder %s29, 0
        // Predicated region
        $region37: #{contrastive_loss.1} parent=27 // pred_check
          %p235 = pneg %p234
        $region38: #{contrastive_loss.1} parent=27 // pred_check_branch
          %237 = sbr.rel (%p235) target = $region40
        $region39: #{contrastive_loss.1} parent=27 // pred_region
          %vm238 = vcmask 0
          %239 = vst.msk [vmem:[%s228] sm:$0x1] %vm238, 0.0
        $region40: #{contrastive_loss.1} parent=27 // pred_fallthru
          _
        %v240 = vld [vmem:[%s197] sm:$0xff]
        %v241 = vld [vmem:[%s197 + $0x8] sm:$0xff]
        %v242 = vld [vmem:[%s197 + $0x10] sm:$0xff]
        %v243 = vld [vmem:[%s197 + $0x18] sm:$0xff]
        %v244 = vld [vmem:[%s197 + $0x20] sm:$0xff]
        %v245 = vld [vmem:[%s197 + $0x28] sm:$0xff]
        %v246 = vld [vmem:[%s197 + $0x30] sm:$0xff]
        %v247 = vld [vmem:[%s197 + $0x38] sm:$0xff]
        %v248 = vld [vmem:[%s205] sm:$0x1]
        %vm249 = vcmask 261120
        %v251 = vsel %vm249, %v248, 0
        %253 = vmatprep.subr.mxu0 %v241
        %254 = vmatpush1.msra.mxu0 %v240
        %255 = vmatprep.subr.mxu0 %v243
        %256 = vmatpush1.msra.mxu0 %v242
        %257 = vmatprep.subr.mxu0 %v245
        %258 = vmatpush1.msra.mxu0 %v244
        %259 = vmatprep.subr.mxu0 %v247
        %260 = vmatpush1.msra.mxu0 %v246
        %261 = vmatprep.subr.mxu0 0.0
        %262 = vmatpush1.msra.mxu0 0.0
        %263 = vmatprep.subr.mxu0 0.0
        %264 = vmatpush1.msra.mxu0 0.0
        %265 = vmatprep.subr.mxu0 0.0
        %266 = vmatpush1.msra.mxu0 0.0
        %267 = vmatprep.subr.mxu0 0.0
        %268 = vmatpush1.msra.mxu0 0.0
        %269 = vmatprep.subr.mxu0 0.0
        %270 = vmatpush1.msra.mxu0 0.0
        %271 = vmatprep.subr.mxu0 0.0
        %272 = vmatpush1.msra.mxu0 0.0
        %273 = vmatprep.subr.mxu0 0.0
        %274 = vmatpush1.msra.mxu0 0.0
        %275 = vmatprep.subr.mxu0 0.0
        %276 = vmatpush1.msra.mxu0 0.0
        %277 = vmatprep.subr.mxu0 0.0
        %278 = vmatpush1.msra.mxu0 0.0
        %279 = vmatprep.subr.mxu0 0.0
        %280 = vmatpush1.msra.mxu0 0.0
        %281 = vmatprep.subr.mxu0 0.0
        %282 = vmatpush1.msra.mxu0 0.0
        %283 = vmatprep.subr.mxu0 0.0
        %284 = vmatpush1.msra.mxu0 0.0
        %285 = vmatprep.subr.mxu0 0.0
        %286 = vmatpush1.msra.mxu0 0.0
        %287 = vmatprep.subr.mxu0 0.0
        %288 = vmatpush1.msra.mxu0 0.0
        %289 = vmatprep.subr.mxu0 0.0
        %290 = vmatpush1.msra.mxu0 0.0
        %291 = vmatprep.subr.mxu0 0.0
        %292 = vmatpush1.msra.mxu0 0.0
        %293 = vmatprep.subr.mxu0 0.0
        %294 = vmatpush1.msra.mxu0 0.0
        %295 = vmatprep.subr.mxu0 0.0
        %296 = vmatpush1.msra.mxu0 0.0
        %297 = vmatprep.subr.mxu0 0.0
        %298 = vmatpush1.msra.mxu0 0.0
        %299 = vmatprep.subr.mxu0 0.0
        %300 = vmatpush1.msra.mxu0 0.0
        %301 = vmatprep.subr.mxu0 0.0
        %302 = vmatpush1.msra.mxu0 0.0
        %303 = vmatprep.subr.mxu0 0.0
        %304 = vmatpush1.msra.mxu0 0.0
        %305 = vmatprep.subr.mxu0 0.0
        %306 = vmatpush1.msra.mxu0 0.0
        %307 = vmatprep.subr.mxu0 0.0
        %308 = vmatpush1.msra.mxu0 0.0
        %309 = vmatprep.subr.mxu0 0.0
        %310 = vmatpush1.msra.mxu0 0.0
        %311 = vmatprep.subr.mxu0 0.0
        %312 = vmatpush1.msra.mxu0 0.0
        %313 = vmatprep.subr.mxu0 0.0
        %314 = vmatpush1.msra.mxu0 0.0
        %315 = vmatprep.subr.mxu0 0.0
        %316 = vmatpush1.msra.mxu0 0.0
        %317 = vmatprep.mubr.f32.mxu0 0.0
        %318 = vmatmul.mubr.f32.gmra.mrb[0].mxu0 %v251
        %v319 = vpop.f32.mrb[0].mxu0
        %v320 = vadd.f32 0.0, %v319
        %v321 = vpop.f32.mrb[0].mxu0
        %v322 = vadd.f32 0.0, %v321
        %323 = vdwg.mxu0
        %v324 = vmul.f32 %v240, %v240
        %v325 = vmul.f32 %v241, %v241
        %v326 = vmul.f32 %v242, %v242
        %v327 = vmul.f32 %v243, %v243
        %v328 = vmul.f32 %v244, %v244
        %v329 = vmul.f32 %v245, %v245
        %v330 = vmul.f32 %v246, %v246
        %v331 = vmul.f32 %v247, %v247
        %v332 = vadd.f32 %v324, %v326
        %v333 = vadd.f32 %v332, %v328
        %v334 = vadd.f32 %v333, %v330
        %v335 = vrot.slane %v334, 4
        %v336 = vadd.f32 %v334, %v335
        %v337 = vrot.slane %v336, 2
        %v338 = vadd.f32 %v336, %v337
        %v339 = vrot.slane %v338, 1
        %v340 = vadd.f32 %v338, %v339
        %v341 = vadd.f32 %v325, %v327
        %v342 = vadd.f32 %v341, %v329
        %v343 = vadd.f32 %v342, %v331
        %v344 = vrot.slane %v343, 4
        %v345 = vadd.f32 %v343, %v344
        %v346 = vrot.slane %v345, 2
        %v347 = vadd.f32 %v345, %v346
        %v348 = vrot.slane %v347, 1
        %v349 = vadd.f32 %v347, %v348
        %v350 = vmax.f32 %v340, 1e-16
        %v351 = vmax.f32 %v349, 1e-16
        %v352 = vrsqrt.pop %v350
        %v353 = vrsqrt.pop %v351
        %v354 = vmul.f32 %v320, %v352
        %v355 = vmul.f32 %v322, %v353
        %v356 = vmax.f32 %v354, 0.0
        %v357 = vmax.f32 %v355, 0.0
        %v358 = vand.u32 2147483647, %v354
        %v359 = vand.u32 2147483647, %v355
        %v360 = vsub.f32 0.0, %v358
        %v361 = vsub.f32 0.0, %v359
        %v362 = vmul.f32 %v360, 1.442695
        %v363 = vpow.pop %v362
        %v364 = vmul.f32 %v361, 1.442695
        %v365 = vpow.pop %v364
        %v366 = vadd.f32 %v363, 1.0
        %v367 = vlog2.pop %v366
        %v368 = vmul.f32 %v367, 0.6931472
        %v369 = vmul.f32 -0.5, %v363
        %v370 = vadd.f32 %v369, 1.0
        %v371 = vmul.f32 %v370, %v363
        %v372 = vand.u32 2147483647, %v363
        %vm373 = vcmp.lt.f32.partialorder %v372, 0.0004427343
        %v374 = vsel %vm373, %v371, %v368
        %v375 = vadd.f32 %v365, 1.0
        %v376 = vlog2.pop %v375
        %v377 = vmul.f32 %v376, 0.6931472
        %v378 = vmul.f32 -0.5, %v365
        %v379 = vadd.f32 %v378, 1.0
        %v380 = vmul.f32 %v379, %v365
        %v381 = vand.u32 2147483647, %v365
        %vm382 = vcmp.lt.f32.partialorder %v381, 0.0004427343
        %v383 = vsel %vm382, %v380, %v377
        %v384 = vadd.f32 %v356, %v374
        %v385 = vadd.f32 %v357, %v383
        %s386 = sadd.s32 %s28, %s29
        %v387 = vlaneseq
        %v388 = vand.u32 %v387, 127
        %v389 = vadd.s32 %v388, 128
        %s390 = smul.u32 %s386, 256
        %s391 = ssub.s32 256, %s390
        %v392 = vstv %s391
        %vm393 = vcmp.lt.s32.totalorder %v388, %v392
        %vm394 = vcmp.lt.s32.totalorder %v389, %v392
        %v395 = vsel %vm393, %v384, 0.0
        %v396 = vsel %vm394, %v385, 0.0
        %v397 = vld [vmem:[%s228] sm:$0x1]
        %vm398 = vcmask 1040384
        %v399 = vsel %vm398, %v395, 0.0
        %v400 = vsel %vm398, %v396, 0.0
        %v401 = vadd.f32 %v399, %v400
        %402 = vadd.xlane.f32.xlu0 %v401
        %v403 = vpop.xlane.xlu0 %402
        %v404 = vadd.f32 %v397, %v403
        %vm405 = vcmask 0
        %406 = vst.msk [vmem:[%s228] sm:$0x1] %vm405, %v404
        %s407 = sand.u32 %s111, 1
        %s408 = scalar_lea.sflag [#allocation4], %s407
        %s409 = sand.u32 %s111, 1
        %s410 = scalar_lea.vmem [#allocation7], %s409
        // Predicated region
        $region41: #{contrastive_loss.1} parent=27 // pred_check
          %p411 = pneg %p121
        $region42: #{contrastive_loss.1} parent=27 // pred_check_branch
          %413 = sbr.rel (%p411) target = $region44
        $region43: #{contrastive_loss.1} parent=27 // pred_region
          %s414 = sadd.s32 %s27, %s28
          %s416 = ssub.s32 16, 16
          %417 = vsyncadd %s408, %s416
          %s418 = smul.addr %s414, 16
          %s419 = scalar_lea.hbm %s2, %s418
          %s421 = sshll.u32 %s410, 4
          %s422 = int_to_ptr.vmem [resolvable:$true] %s421
          %424 = dma.vmem_to_hbm [thread:$0]  %s422, 16, %s419, %s408
        $region44: #{contrastive_loss.1} parent=27 // pred_fallthru
          _
      $region28: #{contrastive_loss.1} parent=5 // pred_fallthru
        _
      %p425 = scmp.le.s32.totalorder 2, %s17
      // Predicated region
      $region45: #{contrastive_loss.1} parent=5 // pred_check
        %p426 = pneg %p425
      $region46: #{contrastive_loss.1} parent=5 // pred_check_branch
        %428 = sbr.rel (%p426) target = $region48
      $region47: #{contrastive_loss.1} parent=5 // pred_region
        %s429 = ssub.s32 %s17, 2
        // Predicated region
        $region49: #{contrastive_loss.1} parent=47 // pred_check
          %p430 = pneg %p127
        $region50: #{contrastive_loss.1} parent=47 // pred_check_branch
          %432 = sbr.rel (%p430) target = $region52
        $region51: #{contrastive_loss.1} parent=47 // pred_region
          %s433 = sand.u32 %s112, 1
          %s434 = scalar_lea.sflag [#allocation4], %s433
          %s435 = sand.u32 %s112, 1
          %s436 = scalar_lea.vmem [#allocation7], %s435
          %437 = dma.done %s434, 16
        $region52: #{contrastive_loss.1} parent=47 // pred_fallthru
          _
      $region48: #{contrastive_loss.1} parent=5 // pred_fallthru
        _
    $region6: #{contrastive_loss.1} parent=1 // loop_footer
      %s21 = sadd.s32 1, %s17
    $region7: #{contrastive_loss.1} parent=1 // loop_footer_branch
      %16 = sbr.rel target = $region3
    $region8: #{contrastive_loss.1} parent=1 // loop_exit
      _
    %438 = vsyncpa [#allocation3], 1
    %s439 = scalar_lea.sflag [#allocation3], 1
    %440 = vsyncpa %s439, 1
    %441 = vsyncpa [#allocation6], 1
    %s442 = scalar_lea.sflag [#allocation6], 1
    %443 = vsyncpa %s442, 1
    %444 = vsyncpa [#allocation4], 1
    %s445 = scalar_lea.sflag [#allocation4], 1
    %446 = vsyncpa %s445, 1

</llo_original>
